<compile_context>
chip_gen: v7x
topology: tpu7x:2x2x1
jax: 0.10.0
libtpu: 0.0.40
codegen_flags: <defaults>
</compile_context>

<pallas_src>
import jax
import jax.numpy as jnp
from jax.experimental import pallas as pl
from jax.experimental.pallas import tpu as pltpu

LN_EPS = 1e-5
BN_EPS = 1e-5

NODE_TILE_TARGET = 256     # rows of the node kernel tile
EDGE_TILE_TARGET = 4096    # edges per tile (sized for v7x's 64 MiB VMEM; v6e can go 2x)
VMEM_LIMIT_BYTES = 48 * 1024 * 1024


# ------------------------------ helpers ------------------------------------ #

def _round_up(x, m):
    return ((x + m - 1) // m) * m


def _tile(n, target):
    """Pick a tile size (multiple of 8, <= target) and the padded extent it divides."""
    t = min(target, _round_up(n, 8))
    return t, _round_up(n, t)


def _pad_rows(x, rows):
    if x.shape[0] == rows:
        return x
    pad = jnp.zeros((rows - x.shape[0],) + x.shape[1:], x.dtype)
    return jnp.concatenate([x, pad], axis=0)


# ------------------------------ kernels ------------------------------------ #

def _node_kernel(h_ref, local_ref, w12_ref, b12_ref, band_a_ref, band_b_ref,
                 bias_a_ref, bias_b_ref,
                 hp1_ref, hp2_ref, la_ref, lb_ref):
    hh = hp1_ref.shape[-1]                      # H*H

    # fused proj1|proj2: one MXU matmul + ReLU (dropout = identity in eval mode)
    hp = jnp.dot(h_ref[...].astype(jnp.bfloat16), w12_ref[...],
                 preferred_element_type=jnp.float32) + b12_ref[...]
    hp = jnp.maximum(hp, 0.0)
    hp1_ref[...] = hp[:, :hh].astype(jnp.bfloat16)
    hp2_ref[...] = hp[:, hh:].astype(jnp.bfloat16)

    # LayerNorm(local): gamma/beta and the conv bias are pre-folded into the band
    # matrices / bias rows, so only the normalization is computed here.
    x = local_ref[...]
    mu = jnp.mean(x, axis=-1, keepdims=True)
    var = jnp.mean(jnp.square(x - mu), axis=-1, keepdims=True)
    nrm = ((x - mu) * jax.lax.rsqrt(var + LN_EPS)).astype(jnp.bfloat16)

    # Conv1d(2->1, k=3, pad=1) as banded matmuls (src half gets the conv bias folded in)
    la_ref[...] = (jnp.dot(nrm, band_a_ref[...], preferred_element_type=jnp.float32)
                   + bias_a_ref[...]).astype(jnp.bfloat16)
    lb_ref[...] = (jnp.dot(nrm, band_b_ref[...], preferred_element_type=jnp.float32)
                   + bias_b_ref[...]).astype(jnp.bfloat16)


def _edge_kernel(src_ref, dst_ref, e_ref, src_tab_ref, dst_tab_ref,
                 w_loc_ref, b_loc_ref, w_glob_ref, b_glob_ref, out_ref):
    te = src_ref.shape[0]
    n_nodes = src_tab_ref.shape[0]
    hdim = out_ref.shape[-1]
    hh = hdim * hdim

    # one-hot gather matrices from the per-tile edge endpoints (iota hoisted & shared)
    node_iota = jax.lax.broadcasted_iota(jnp.int32, (te, n_nodes), 1)
    oh_src = jnp.where(node_iota == src_ref[...], 1.0, 0.0).astype(jnp.bfloat16)
    oh_dst = jnp.where(node_iota == dst_ref[...], 1.0, 0.0).astype(jnp.bfloat16)

    # ONE gather matmul per endpoint: src -> [hp1 | la], dst -> [hp2 | lb]
    sg = jnp.dot(oh_src, src_tab_ref[...], preferred_element_type=jnp.float32)  # [TE, H*H+in]
    dg = jnp.dot(oh_dst, dst_tab_ref[...], preferred_element_type=jnp.float32)  # [TE, H+in]
    a_flat = sg[:, :hh]          # hp1[src] flat   [TE, H*H]
    la_src = sg[:, hh:]          # conv src half   [TE, in_dim]
    b_vec = dg[:, :hdim]         # hp2[dst]        [TE, H]
    lb_dst = dg[:, hdim:]        # conv dst half   [TE, in_dim]

    # ---- local branch: conv(src,dst) -> ReLU -> folded(edge_proj2 + bn_local_e) -> ReLU ----
    conv = jnp.maximum(la_src + lb_dst, 0.0)
    lr_local = jnp.dot(conv.astype(jnp.bfloat16), w_loc_ref[...],
                       preferred_element_type=jnp.float32) + b_loc_ref[...]
    lr_local = jnp.maximum(lr_local, 0.0)

    # ---- global branch: per-edge bilinear, kept flat/lane-dense as [TE, H*H] ----
    g_pre = a_flat * jnp.tile(b_vec, (1, hdim))                    # [TE, H*H]
    # w_glob already contains: d-reduction x bn_global x edge_proj3 x bn_global_e
    lr_global = jnp.dot(g_pre.astype(jnp.bfloat16), w_glob_ref[...],
                        preferred_element_type=jnp.float32) + b_glob_ref[...]
    lr_global = jnp.maximum(lr_global, 0.0)

    out_ref[...] = lr_local + lr_global + e_ref[...]    # e_out = local + global + e


# ------------------------------ wrapper ------------------------------------- #

def mefg_forward(params, local, h, e, src_ids, dst_ids, hidden_dim):
    H = hidden_dim
    N, in_dim = h.shape
    E = e.shape[0]

    TN, n_pad = _tile(N, NODE_TILE_TARGET)
    TE, e_pad = _tile(E, EDGE_TILE_TARGET)
    n8 = _round_up(N, 8)

    h_p = _pad_rows(h, n_pad)
    local_p = _pad_rows(local, n_pad)
    e_p = _pad_rows(e, e_pad)
    src_p = _pad_rows(src_ids.reshape(E, 1).astype(jnp.int32), e_pad)
    dst_p = _pad_rows(dst_ids.reshape(E, 1).astype(jnp.int32), e_pad)

    vmem_full = pl.BlockSpec(memory_space=pltpu.MemorySpace.VMEM)
    cparams = pltpu.CompilerParams(dimension_semantics=("parallel",),
                                   vmem_limit_bytes=VMEM_LIMIT_BYTES)

    # ---- node kernel: fused projections + LayerNorm + node-side conv halves ----
    hp1, hp2, la, lb = pl.pallas_call(
        _node_kernel,
        grid=(n_pad // TN,),
        out_shape=(jax.ShapeDtypeStruct((n_pad, H * H), jnp.bfloat16),
                   jax.ShapeDtypeStruct((n_pad, H), jnp.bfloat16),
                   jax.ShapeDtypeStruct((n_pad, in_dim), jnp.bfloat16),
                   jax.ShapeDtypeStruct((n_pad, in_dim), jnp.bfloat16)),
        in_specs=[pl.BlockSpec((TN, in_dim), lambda i: (i, 0)),
                  pl.BlockSpec((TN, in_dim), lambda i: (i, 0)),
                  vmem_full, vmem_full, vmem_full, vmem_full, vmem_full, vmem_full],
        out_specs=(pl.BlockSpec((TN, H * H), lambda i: (i, 0)),
                   pl.BlockSpec((TN, H), lambda i: (i, 0)),
                   pl.BlockSpec((TN, in_dim), lambda i: (i, 0)),
                   pl.BlockSpec((TN, in_dim), lambda i: (i, 0))),
        compiler_params=cparams,
    )(h_p, local_p, params['w12'], params['b12'],
      params['band_a'], params['band_b'], params['bias_a'], params['bias_b'])

    # Keep only the 8-aligned node rows so the edge-kernel one-hot width tracks N
    # (not the node-tile padding), and pack each endpoint's gather data into one
    # table so the edge kernel does a single gather matmul per endpoint.
    src_tab = jnp.concatenate([hp1[:n8], la[:n8]], axis=1)   # [n8, H*H + in_dim]
    dst_tab = jnp.concatenate([hp2[:n8], lb[:n8]], axis=1)   # [n8, H + in_dim]

    # ---- edge kernel: tiled over E, in-kernel gathers from the resident node tables ----
    out = pl.pallas_call(
        _edge_kernel,
        grid=(e_pad // TE,),
        out_shape=jax.ShapeDtypeStruct((e_pad, H), jnp.float32),
        in_specs=[pl.BlockSpec((TE, 1), lambda i: (i, 0)),
                  pl.BlockSpec((TE, 1), lambda i: (i, 0)),
                  pl.BlockSpec((TE, H), lambda i: (i, 0)),
                  vmem_full, vmem_full,                      # src_tab, dst_tab
                  vmem_full, vmem_full, vmem_full, vmem_full],  # w_loc, b_loc, w_glob, b_glob
        out_specs=pl.BlockSpec((TE, H), lambda i: (i, 0)),
        compiler_params=cparams,
    )(src_p, dst_p, e_p, src_tab, dst_tab,
      params['w_loc'], params['b_loc'], params['w_glob'], params['b_glob'])

    return out[:E]


# ------------------------------ reference ----------------------------------- #

def mefg_reference(params, local, h, e, src_ids, dst_ids, hidden_dim):
    """Pure-JAX mirror of the kernel math (same folds / bf16 cast points)."""
    H = hidden_dim
    f32, bf16 = jnp.float32, jnp.bfloat16
    hp = jnp.maximum(jnp.dot(h.astype(bf16), params['w12'],
                             preferred_element_type=f32) + params['b12'], 0.0)
    hp1 = hp[:, :H * H].astype(bf16)
    hp2 = hp[:, H * H:].astype(bf16)

    mu = jnp.mean(local, axis=-1, keepdims=True)
    var = jnp.mean(jnp.square(local - mu), axis=-1, keepdims=True)
    nrm = ((local - mu) * jax.lax.rsqrt(var + LN_EPS)).astype(bf16)
    la = (jnp.dot(nrm, params['band_a'], preferred_element_type=f32)
          + params['bias_a']).astype(bf16)
    lb = (jnp.dot(nrm, params['band_b'], preferred_element_type=f32)
          + params['bias_b']).astype(bf16)

    conv = jnp.maximum(la[src_ids].astype(f32) + lb[dst_ids].astype(f32), 0.0)
    lr_local = jnp.maximum(
        jnp.dot(conv.astype(bf16), params['w_loc'], preferred_element_type=f32)
        + params['b_loc'], 0.0)

    a_flat = hp1[src_ids].astype(f32)
    b_vec = hp2[dst_ids].astype(f32)
    g_pre = a_flat * jnp.tile(b_vec, (1, H))
    lr_global = jnp.maximum(
        jnp.dot(g_pre.astype(bf16), params['w_glob'], preferred_element_type=f32)
        + params['b_glob'], 0.0)
    return lr_local + lr_global + e


# --------------------------- parameter init --------------------------------- #

def init_params(key, in_dim, hidden_dim):
    H = hidden_dim
    ks = jax.random.split(key, 11)

    def lin(k, fan_in, fan_out):
        kw, kb = jax.random.split(k)
        w = jax.random.normal(kw, (fan_out, fan_in), jnp.float32) / jnp.sqrt(float(fan_in))
        b = 0.01 * jax.random.normal(kb, (fan_out,), jnp.float32)
        return w, b

    def bn_fold(k, dim):   # eval-mode BN (running mean=0, var=1) -> per-feature scale/shift
        kg, kb = jax.random.split(k)
        gamma = 1.0 + 0.1 * jax.random.normal(kg, (dim,), jnp.float32)
        beta = 0.1 * jax.random.normal(kb, (dim,), jnp.float32)
        run_mean = jnp.zeros((dim,), jnp.float32)
        run_var = jnp.ones((dim,), jnp.float32)
        scale = gamma * jax.lax.rsqrt(run_var + BN_EPS)
        shift = beta - run_mean * scale
        return scale, shift

    w1, b1 = lin(ks[0], in_dim, H * H)       # proj1
    w2, b2 = lin(ks[1], in_dim, H)           # proj2
    wep2, bep2 = lin(ks[2], in_dim, H)       # edge_proj2
    wep3, bep3 = lin(ks[3], H, H)            # edge_proj3
    conv_w = 0.3 * jax.random.normal(ks[4], (2, 3), jnp.float32)   # Conv1d(2,1,3).weight[0]
    conv_b = 0.01 * jax.random.normal(ks[5], (1,), jnp.float32)
    ln_gamma = 1.0 + 0.1 * jax.random.normal(ks[6], (in_dim,), jnp.float32)
    ln_beta = 0.1 * jax.random.normal(ks[7], (in_dim,), jnp.float32)
    s_g, t_g = bn_fold(ks[8], H)     # bn_global
    s_ge, t_ge = bn_fold(ks[9], H)   # bn_node_lr_e_global
    s_le, t_le = bn_fold(ks[10], H)  # bn_node_lr_e_local

    # fused node projection weight [in_dim, H*H + H]
    w12 = jnp.concatenate([w1.T, w2.T], axis=1).astype(jnp.bfloat16)
    b12 = jnp.concatenate([b1, b2]).reshape(1, -1)

    # Conv1d taps as banded matrices: conv = LN(src) @ A + LN(dst) @ B + bias
    def band(taps):
        idx = jnp.arange(in_dim)
        m = jnp.zeros((in_dim, in_dim), jnp.float32)
        m = m.at[idx, idx].set(taps[1])                 # center tap
        m = m.at[idx[:-1], idx[1:]].set(taps[0])        # in[i-1] tap
        m = m.at[idx[1:], idx[:-1]].set(taps[2])        # in[i+1] tap
        return m
    band_a_f = band(conv_w[0])
    band_b_f = band(conv_w[1])
    # fold LayerNorm affine (gamma row-scale, beta additive row) and conv bias in
    band_a = (ln_gamma[:, None] * band_a_f).astype(jnp.bfloat16)
    band_b = (ln_gamma[:, None] * band_b_f).astype(jnp.bfloat16)
    bias_a = (ln_beta @ band_a_f + conv_b[0]).reshape(1, -1)
    bias_b = (ln_beta @ band_b_f).reshape(1, -1)

    # fold bn_node_lr_e_local into edge_proj2
    w_loc = (wep2.T * s_le[None, :]).astype(jnp.bfloat16)          # [in_dim, H]
    b_loc = (bep2 * s_le + t_le).reshape(1, -1)

    # fold bn_global + edge_proj3 + bn_node_lr_e_global, and the d-reduction, into one weight
    w3_fold = (s_g[:, None] * wep3.T) * s_ge[None, :]              # [H, H]
    w_glob = jnp.repeat(w3_fold, H, axis=0).astype(jnp.bfloat16)   # [(k*H+d), j] = w3_fold[k, j]
    b_glob = ((t_g @ wep3.T + bep3) * s_ge + t_ge).reshape(1, -1)

    return dict(
        w12=w12, b12=b12,
        band_a=band_a, band_b=band_b, bias_a=bias_a, bias_b=bias_b,
        w_loc=w_loc, b_loc=b_loc, w_glob=w_glob, b_glob=b_glob,
    )


# -------------------------------- main --------------------------------------- #

if __name__ == "__main__":
    key = jax.random.PRNGKey(0)
    N, in_dim, hidden_dim = 8, 32, 16

    # simple bidirectional ring graph: E = 2N edges (stands in for the DGL graph)
    fwd = jnp.arange(N, dtype=jnp.int32)
    src_ids = jnp.concatenate([fwd, (fwd + 1) % N])
    dst_ids = jnp.concatenate([(fwd + 1) % N, fwd])
    E = int(src_ids.shape[0])

    k1, k2, k3, kp = jax.random.split(key, 4)
    h = jax.random.normal(k1, (N, in_dim), jnp.float32)       # node features for proj1/proj2
    local = jax.random.normal(k2, (N, in_dim), jnp.float32)   # g.ndata['local']
    e = jax.random.normal(k3, (E, hidden_dim), jnp.float32)   # input edge features

    params = init_params(kp, in_dim, hidden_dim)

    out = mefg_forward(params, local, h, e, src_ids, dst_ids, hidden_dim)
    out = jax.block_until_ready(out)

    ref = mefg_reference(params, local, h, e, src_ids, dst_ids, hidden_dim)
    assert out.shape == (E, hidden_dim)
    assert bool(jnp.all(jnp.isfinite(out)))
    max_err = float(jnp.max(jnp.abs(out - ref)))
    assert max_err < 5e-2, f"kernel/reference mismatch: max abs err {max_err}"
    print("KERNEL_OK")
</pallas_src>

<mosaic_0001>
module attributes {stable_mosaic.version = 11 : i64} {
  func.func @_node_kernel(%arg0: i32, %arg1: memref<8x32xf32, #tpu.memory_space<vmem>>, %arg2: memref<8x32xf32, #tpu.memory_space<vmem>>, %arg3: memref<32x272xbf16, #tpu.memory_space<vmem>>, %arg4: memref<1x272xf32, #tpu.memory_space<vmem>>, %arg5: memref<32x32xbf16, #tpu.memory_space<vmem>>, %arg6: memref<32x32xbf16, #tpu.memory_space<vmem>>, %arg7: memref<1x32xf32, #tpu.memory_space<vmem>>, %arg8: memref<1x32xf32, #tpu.memory_space<vmem>>, %arg9: memref<8x256xbf16, #tpu.memory_space<vmem>>, %arg10: memref<8x16xbf16, #tpu.memory_space<vmem>>, %arg11: memref<8x32xbf16, #tpu.memory_space<vmem>>, %arg12: memref<8x32xbf16, #tpu.memory_space<vmem>>) attributes {dimension_semantics = [#tpu.dimension_semantics<parallel>], iteration_bounds = array<i64: 1>, scalar_prefetch = 0 : i64, scratch_operands = 0 : i64, tpu.core_type = #tpu.core_type<tc>, window_params = [{transform_indices = @transform_0, window_bounds = array<i64: 8, 32>}, {transform_indices = @transform_1, window_bounds = array<i64: 8, 32>}, {pipeline_mode = #tpu.pipeline_mode<synchronous>, transform_indices = @transform_2, window_bounds = array<i64: 32, 272>}, {pipeline_mode = #tpu.pipeline_mode<synchronous>, transform_indices = @transform_3, window_bounds = array<i64: 1, 272>}, {pipeline_mode = #tpu.pipeline_mode<synchronous>, transform_indices = @transform_4, window_bounds = array<i64: 32, 32>}, {pipeline_mode = #tpu.pipeline_mode<synchronous>, transform_indices = @transform_5, window_bounds = array<i64: 32, 32>}, {pipeline_mode = #tpu.pipeline_mode<synchronous>, transform_indices = @transform_6, window_bounds = array<i64: 1, 32>}, {pipeline_mode = #tpu.pipeline_mode<synchronous>, transform_indices = @transform_7, window_bounds = array<i64: 1, 32>}, {transform_indices = @transform_8, window_bounds = array<i64: 8, 256>}, {transform_indices = @transform_9, window_bounds = array<i64: 8, 16>}, {transform_indices = @transform_10, window_bounds = array<i64: 8, 32>}, {transform_indices = @transform_11, window_bounds = array<i64: 8, 32>}]} {
    %c0 = arith.constant 0 : index
    %c0_0 = arith.constant 0 : index
    %0 = vector.load %arg1[%c0, %c0_0] : memref<8x32xf32, #tpu.memory_space<vmem>>, vector<8x32xf32>
    %1 = arith.truncf %0 : vector<8x32xf32> to vector<8x32xbf16>
    %c0_1 = arith.constant 0 : index
    %c0_2 = arith.constant 0 : index
    %2 = vector.load %arg3[%c0_1, %c0_2] : memref<32x272xbf16, #tpu.memory_space<vmem>>, vector<32x272xbf16>
    %cst = arith.constant dense<0.000000e+00> : vector<8x272xf32>
    %3 = tpu.matmul %1, %2, %cst {dimension_numbers = #tpu.dot_dimension_numbers<[1], [0], [0], [1], [0, 0, 1, 1], [], []>} : vector<8x32xbf16>, vector<32x272xbf16>, vector<8x272xf32> -> vector<8x272xf32>
    %c0_3 = arith.constant 0 : index
    %c0_4 = arith.constant 0 : index
    %4 = vector.load %arg4[%c0_3, %c0_4] : memref<1x272xf32, #tpu.memory_space<vmem>>, vector<1x272xf32>
    %5 = vector.broadcast %4 : vector<1x272xf32> to vector<8x272xf32>
    %6 = arith.addf %3, %5 : vector<8x272xf32>
    %cst_5 = arith.constant 0.000000e+00 : f32
    %7 = vector.broadcast %cst_5 : f32 to vector<8x272xf32>
    %8 = arith.maximumf %6, %7 : vector<8x272xf32>
    %9 = vector.extract_strided_slice %8 {offsets = [0, 0], sizes = [8, 256], strides = [1, 1]} : vector<8x272xf32> to vector<8x256xf32>
    %10 = arith.truncf %9 : vector<8x256xf32> to vector<8x256xbf16>
    %c0_6 = arith.constant 0 : index
    %c0_7 = arith.constant 0 : index
    %11 = vector.load %arg9[%c0_6, %c0_7] : memref<8x256xbf16, #tpu.memory_space<vmem>>, vector<8x256xbf16>
    tpu.vector_store %arg9[%c0_6, %c0_7], %10 {strides = array<i32>} : memref<8x256xbf16, #tpu.memory_space<vmem>>, vector<8x256xbf16>,
    %12 = vector.extract_strided_slice %8 {offsets = [0, 256], sizes = [8, 16], strides = [1, 1]} : vector<8x272xf32> to vector<8x16xf32>
    %13 = arith.truncf %12 : vector<8x16xf32> to vector<8x16xbf16>
    %c0_8 = arith.constant 0 : index
    %c0_9 = arith.constant 0 : index
    %14 = vector.load %arg10[%c0_8, %c0_9] : memref<8x16xbf16, #tpu.memory_space<vmem>>, vector<8x16xbf16>
    tpu.vector_store %arg10[%c0_8, %c0_9], %13 {strides = array<i32>} : memref<8x16xbf16, #tpu.memory_space<vmem>>, vector<8x16xbf16>,
    %c0_10 = arith.constant 0 : index
    %c0_11 = arith.constant 0 : index
    %15 = vector.load %arg2[%c0_10, %c0_11] : memref<8x32xf32, #tpu.memory_space<vmem>>, vector<8x32xf32>
    %cst_12 = arith.constant dense<0.000000e+00> : vector<8xf32>
    %16 = vector.multi_reduction <add>, %15, %cst_12 [1] : vector<8x32xf32> to vector<8xf32>
    %17 = vector.shape_cast %16 : vector<8xf32> to vector<8x1xf32>
    %cst_13 = arith.constant 3.200000e+01 : f32
    %18 = vector.broadcast %cst_13 : f32 to vector<8x1xf32>
    %19 = arith.divf %17, %18 : vector<8x1xf32>
    %20 = vector.broadcast %19 : vector<8x1xf32> to vector<8x32xf32>
    %21 = arith.subf %15, %20 : vector<8x32xf32>
    %22 = arith.mulf %21, %21 : vector<8x32xf32>
    %cst_14 = arith.constant dense<0.000000e+00> : vector<8xf32>
    %23 = vector.multi_reduction <add>, %22, %cst_14 [1] : vector<8x32xf32> to vector<8xf32>
    %24 = vector.shape_cast %23 : vector<8xf32> to vector<8x1xf32>
    %cst_15 = arith.constant 3.200000e+01 : f32
    %25 = vector.broadcast %cst_15 : f32 to vector<8x1xf32>
    %26 = arith.divf %24, %25 : vector<8x1xf32>
    %27 = vector.broadcast %19 : vector<8x1xf32> to vector<8x32xf32>
    %28 = arith.subf %15, %27 : vector<8x32xf32>
    %cst_16 = arith.constant 9.99999974E-6 : f32
    %29 = vector.broadcast %cst_16 : f32 to vector<8x1xf32>
    %30 = arith.addf %26, %29 : vector<8x1xf32>
    %31 = math.rsqrt %30 : vector<8x1xf32>
    %32 = vector.broadcast %31 : vector<8x1xf32> to vector<8x32xf32>
    %33 = arith.mulf %28, %32 : vector<8x32xf32>
    %34 = arith.truncf %33 : vector<8x32xf32> to vector<8x32xbf16>
    %c0_17 = arith.constant 0 : index
    %c0_18 = arith.constant 0 : index
    %35 = vector.load %arg5[%c0_17, %c0_18] : memref<32x32xbf16, #tpu.memory_space<vmem>>, vector<32x32xbf16>
    %cst_19 = arith.constant dense<0.000000e+00> : vector<8x32xf32>
    %36 = tpu.matmul %34, %35, %cst_19 {dimension_numbers = #tpu.dot_dimension_numbers<[1], [0], [0], [1], [0, 0, 1, 1], [], []>} : vector<8x32xbf16>, vector<32x32xbf16>, vector<8x32xf32> -> vector<8x32xf32>
    %c0_20 = arith.constant 0 : index
    %c0_21 = arith.constant 0 : index
    %37 = vector.load %arg7[%c0_20, %c0_21] : memref<1x32xf32, #tpu.memory_space<vmem>>, vector<1x32xf32>
    %38 = vector.broadcast %37 : vector<1x32xf32> to vector<8x32xf32>
    %39 = arith.addf %36, %38 : vector<8x32xf32>
    %40 = arith.truncf %39 : vector<8x32xf32> to vector<8x32xbf16>
    %c0_22 = arith.constant 0 : index
    %c0_23 = arith.constant 0 : index
    %41 = vector.load %arg11[%c0_22, %c0_23] : memref<8x32xbf16, #tpu.memory_space<vmem>>, vector<8x32xbf16>
    tpu.vector_store %arg11[%c0_22, %c0_23], %40 {strides = array<i32>} : memref<8x32xbf16, #tpu.memory_space<vmem>>, vector<8x32xbf16>,
    %c0_24 = arith.constant 0 : index
    %c0_25 = arith.constant 0 : index
    %42 = vector.load %arg6[%c0_24, %c0_25] : memref<32x32xbf16, #tpu.memory_space<vmem>>, vector<32x32xbf16>
    %cst_26 = arith.constant dense<0.000000e+00> : vector<8x32xf32>
    %43 = tpu.matmul %34, %42, %cst_26 {dimension_numbers = #tpu.dot_dimension_numbers<[1], [0], [0], [1], [0, 0, 1, 1], [], []>} : vector<8x32xbf16>, vector<32x32xbf16>, vector<8x32xf32> -> vector<8x32xf32>
    %c0_27 = arith.constant 0 : index
    %c0_28 = arith.constant 0 : index
    %44 = vector.load %arg8[%c0_27, %c0_28] : memref<1x32xf32, #tpu.memory_space<vmem>>, vector<1x32xf32>
    %45 = vector.broadcast %44 : vector<1x32xf32> to vector<8x32xf32>
    %46 = arith.addf %43, %45 : vector<8x32xf32>
    %47 = arith.truncf %46 : vector<8x32xf32> to vector<8x32xbf16>
    %c0_29 = arith.constant 0 : index
    %c0_30 = arith.constant 0 : index
    %48 = vector.load %arg12[%c0_29, %c0_30] : memref<8x32xbf16, #tpu.memory_space<vmem>>, vector<8x32xbf16>
    tpu.vector_store %arg12[%c0_29, %c0_30], %47 {strides = array<i32>} : memref<8x32xbf16, #tpu.memory_space<vmem>>, vector<8x32xbf16>,
    return
  }
  func.func @transform_0(%arg0: i32) -> (i32, i32) {
    %c0_i32 = arith.constant 0 : i32
    %c0_i32_0 = arith.constant 0 : i32
    return %arg0, %c0_i32 : i32, i32
  }
  func.func @transform_1(%arg0: i32) -> (i32, i32) {
    %c0_i32 = arith.constant 0 : i32
    %c0_i32_0 = arith.constant 0 : i32
    return %arg0, %c0_i32 : i32, i32
  }
  func.func @transform_2(%arg0: i32) -> (i32, i32) {
    %c0_i32 = arith.constant 0 : i32
    %c0_i32_0 = arith.constant 0 : i32
    %c0_i32_1 = arith.constant 0 : i32
    return %c0_i32, %c0_i32_0 : i32, i32
  }
  func.func @transform_3(%arg0: i32) -> (i32, i32) {
    %c0_i32 = arith.constant 0 : i32
    %c0_i32_0 = arith.constant 0 : i32
    %c0_i32_1 = arith.constant 0 : i32
    return %c0_i32, %c0_i32_0 : i32, i32
  }
  func.func @transform_4(%arg0: i32) -> (i32, i32) {
    %c0_i32 = arith.constant 0 : i32
    %c0_i32_0 = arith.constant 0 : i32
    %c0_i32_1 = arith.constant 0 : i32
    return %c0_i32, %c0_i32_0 : i32, i32
  }
  func.func @transform_5(%arg0: i32) -> (i32, i32) {
    %c0_i32 = arith.constant 0 : i32
    %c0_i32_0 = arith.constant 0 : i32
    %c0_i32_1 = arith.constant 0 : i32
    return %c0_i32, %c0_i32_0 : i32, i32
  }
  func.func @transform_6(%arg0: i32) -> (i32, i32) {
    %c0_i32 = arith.constant 0 : i32
    %c0_i32_0 = arith.constant 0 : i32
    %c0_i32_1 = arith.constant 0 : i32
    return %c0_i32, %c0_i32_0 : i32, i32
  }
  func.func @transform_7(%arg0: i32) -> (i32, i32) {
    %c0_i32 = arith.constant 0 : i32
    %c0_i32_0 = arith.constant 0 : i32
    %c0_i32_1 = arith.constant 0 : i32
    return %c0_i32, %c0_i32_0 : i32, i32
  }
  func.func @transform_8(%arg0: i32) -> (i32, i32) {
    %c0_i32 = arith.constant 0 : i32
    %c0_i32_0 = arith.constant 0 : i32
    return %arg0, %c0_i32 : i32, i32
  }
  func.func @transform_9(%arg0: i32) -> (i32, i32) {
    %c0_i32 = arith.constant 0 : i32
    %c0_i32_0 = arith.constant 0 : i32
    return %arg0, %c0_i32 : i32, i32
  }
  func.func @transform_10(%arg0: i32) -> (i32, i32) {
    %c0_i32 = arith.constant 0 : i32
    %c0_i32_0 = arith.constant 0 : i32
    return %arg0, %c0_i32 : i32, i32
  }
  func.func @transform_11(%arg0: i32) -> (i32, i32) {
    %c0_i32 = arith.constant 0 : i32
    %c0_i32_0 = arith.constant 0 : i32
    return %arg0, %c0_i32 : i32, i32
  }
}

</mosaic_0001>

<llo_original>
// kernel: tpu_custom_call.1
$region0: #{tpu_custom_call.1}
  #allocation0 [shape = 'u32[]', space=smem, size = 0x4, offset = 0x4, fixed_abs, tag = 'smem constant byte address 0x4 - core index']
  #allocation1 [shape = 'u32[144,128]{1,0:T(1,128)}', space=vmem, size = 0x12000, scoped, tag = 'internal scratch']
  %s0 = inlined_call_operand.hbm [shape: f32[8,32], index: 0, kind: input, shape index: {}]
  %s1 = inlined_call_operand.hbm [shape: f32[8,32], index: 1, kind: input, shape index: {}]
  %s2 = inlined_call_operand.hbm [shape: bf16[32,272], index: 2, kind: input, shape index: {}]
  %s3 = inlined_call_operand.hbm [shape: f32[1,272], index: 3, kind: input, shape index: {}]
  %s4 = inlined_call_operand.hbm [shape: bf16[32,32], index: 4, kind: input, shape index: {}]
  %s5 = inlined_call_operand.vmem [shape: bf16[32,32], index: 5, kind: input, shape index: {}]
  %s6 = inlined_call_operand.vmem [shape: f32[1,32], index: 6, kind: input, shape index: {}]
  %s7 = inlined_call_operand.vmem [shape: f32[1,32], index: 7, kind: input, shape index: {}]
  %s8 = inlined_call_operand.hbm [shape: bf16[8,256], index: 8, kind: output, shape index: {0}]
  %s9 = inlined_call_operand.hbm [shape: bf16[8,16], index: 9, kind: output, shape index: {1}]
  %s10 = inlined_call_operand.hbm [shape: bf16[8,32], index: 10, kind: output, shape index: {2}]
  %s11 = inlined_call_operand.hbm [shape: bf16[8,32], index: 11, kind: output, shape index: {3}]
  %12 = xla_tuple %s8, %s9, %s10, %s11
  %s13 = sld [smem:[#allocation0]]
  $region86: #{tpu_custom_call.1} parent=0
    _
  %s15 = ssub.s32 1, %s13
  %s16 = scalar_select 0, %s15, %s13
  $region1: #{tpu_custom_call.1} parent=0
    #allocation2 [shape = 'u8[4096]{0}', space=vmem, size = 0x1000, scoped, tag = 'input window, operand 0, single buffered']
    #allocation3 [shape = 's32[1]{0}', space=sflag, size = 0x4, scoped, tag = 'scoped memory for tpu_custom_call.1']
    #allocation4 [shape = 's32[1]{0}', space=sflag, size = 0x4, scoped, tag = 'scoped memory for tpu_custom_call.1']
    #allocation5 [shape = 'u8[4096]{0}', space=vmem, size = 0x1000, scoped, tag = 'input window, operand 1, single buffered']
    #allocation6 [shape = 's32[1]{0}', space=sflag, size = 0x4, scoped, tag = 'scoped memory for tpu_custom_call.1']
    #allocation7 [shape = 'u8[24576]{0}', space=vmem, size = 0x6000, scoped, tag = 'input window, operand 2, single buffered']
    #allocation8 [shape = 'u8[1536]{0}', space=vmem, size = 0x800, scoped, tag = 'input window, operand 3, single buffered']
    #allocation9 [shape = 's32[1]{0}', space=sflag, size = 0x4, scoped, tag = 'scoped memory for tpu_custom_call.1']
    #allocation10 [shape = 'u8[8192]{0}', space=vmem, size = 0x2000, scoped, tag = 'input window, operand 4, single buffered']
    #allocation11 [shape = 'u8[4096]{0}', space=vmem, size = 0x1000, scoped, tag = 'output window, operand 0, single buffered']
    #allocation12 [shape = 'u8[2048]{0}', space=vmem, size = 0x800, scoped, tag = 'output window, operand 1, single buffered']
    #allocation13 [shape = 's32[1]{0}', space=sflag, size = 0x4, scoped, tag = 'scoped memory for tpu_custom_call.1']
    #allocation14 [shape = 'u8[2048]{0}', space=vmem, size = 0x800, scoped, tag = 'output window, operand 2, single buffered']
    #allocation15 [shape = 'u8[2048]{0}', space=vmem, size = 0x800, scoped, tag = 'output window, operand 3, single buffered']
    #allocation16 [shape = 's32[1]{0}', space=sflag, size = 0x4, scoped, tag = 'scoped memory for tpu_custom_call.1']
    %17 = vsyncpa [#allocation3], 0
    %18 = vsyncpa [#allocation6], 0
    %19 = vsyncpa [#allocation9], 0
    %20 = vsyncpa [#allocation4], 0
    %21 = vsyncpa [#allocation13], 0
    %22 = vsyncpa [#allocation16], 0
    // Predicated region
    $region2: #{tpu_custom_call.1} parent=1 // pred_check
      _
    $region3: #{tpu_custom_call.1} parent=1 // pred_check_branch
      %24 = sbr.rel (0) target = $region5
    $region4: #{tpu_custom_call.1} parent=1 // pred_region
      %s26 = ssub.s32 128, 128
      %27 = vsyncadd [#allocation3], %s26
      %s29 = sshll.u32 [#allocation2], 4
      %s30 = int_to_ptr.vmem [resolvable:$true] %s29
      %32 = dma.hbm_to_vmem [thread:$0]  %s0, 128, %s30, [#allocation3]
    $region5: #{tpu_custom_call.1} parent=1 // pred_fallthru
      _
    // Predicated region
    $region6: #{tpu_custom_call.1} parent=1 // pred_check
      _
    $region7: #{tpu_custom_call.1} parent=1 // pred_check_branch
      %34 = sbr.rel (0) target = $region9
    $region8: #{tpu_custom_call.1} parent=1 // pred_region
      %s36 = ssub.s32 128, 128
      %37 = vsyncadd [#allocation6], %s36
      %s39 = sshll.u32 [#allocation5], 4
      %s40 = int_to_ptr.vmem [resolvable:$true] %s39
      %42 = dma.hbm_to_vmem [thread:$0]  %s1, 128, %s40, [#allocation6]
    $region9: #{tpu_custom_call.1} parent=1 // pred_fallthru
      _
    // Predicated region
    $region10: #{tpu_custom_call.1} parent=1 // pred_check
      _
    $region11: #{tpu_custom_call.1} parent=1 // pred_check_branch
      %44 = sbr.rel (0) target = $region13
    $region12: #{tpu_custom_call.1} parent=1 // pred_region
      %s46 = ssub.s32 768, 768
      %47 = vsyncadd [#allocation6], %s46
      %s48 = sshll.u32 [#allocation7], 4
      %s49 = int_to_ptr.vmem [resolvable:$true] %s48
      %54 = dma.hbm_to_vmem [thread:$0]  %s2, 768, %s49, [#allocation6], 192, 192, 12
    $region13: #{tpu_custom_call.1} parent=1 // pred_fallthru
      _
    // Predicated region
    $region14: #{tpu_custom_call.1} parent=1 // pred_check
      _
    $region15: #{tpu_custom_call.1} parent=1 // pred_check_branch
      %56 = sbr.rel (0) target = $region17
    $region16: #{tpu_custom_call.1} parent=1 // pred_region
      %s58 = ssub.s32 48, 48
      %59 = vsyncadd [#allocation9], %s58
      %s61 = sshll.u32 [#allocation8], 4
      %s62 = int_to_ptr.vmem [resolvable:$true] %s61
      %64 = dma.hbm_to_vmem [thread:$0]  %s3, 48, %s62, [#allocation9]
    $region17: #{tpu_custom_call.1} parent=1 // pred_fallthru
      _
    // Predicated region
    $region18: #{tpu_custom_call.1} parent=1 // pred_check
      _
    $region19: #{tpu_custom_call.1} parent=1 // pred_check_branch
      %66 = sbr.rel (0) target = $region21
    $region20: #{tpu_custom_call.1} parent=1 // pred_region
      %s68 = ssub.s32 256, 256
      %69 = vsyncadd [#allocation9], %s68
      %s70 = sshll.u32 [#allocation10], 4
      %s71 = int_to_ptr.vmem [resolvable:$true] %s70
      %76 = dma.hbm_to_vmem [thread:$0]  %s4, 256, %s71, [#allocation9], 64, 64, 4
    $region21: #{tpu_custom_call.1} parent=1 // pred_fallthru
      _
    // Predicated region
    $region22: #{tpu_custom_call.1} parent=1 // pred_check
      _
    $region23: #{tpu_custom_call.1} parent=1 // pred_check_branch
      %78 = sbr.rel (0) target = $region25
    $region24: #{tpu_custom_call.1} parent=1 // pred_region
      _
    $region25: #{tpu_custom_call.1} parent=1 // pred_fallthru
      _
    // Predicated region
    $region26: #{tpu_custom_call.1} parent=1 // pred_check
      _
    $region27: #{tpu_custom_call.1} parent=1 // pred_check_branch
      %80 = sbr.rel (0) target = $region29
    $region28: #{tpu_custom_call.1} parent=1 // pred_region
      _
    $region29: #{tpu_custom_call.1} parent=1 // pred_fallthru
      _
    // Predicated region
    $region30: #{tpu_custom_call.1} parent=1 // pred_check
      _
    $region31: #{tpu_custom_call.1} parent=1 // pred_check_branch
      %82 = sbr.rel (0) target = $region33
    $region32: #{tpu_custom_call.1} parent=1 // pred_region
      _
    $region33: #{tpu_custom_call.1} parent=1 // pred_fallthru
      _
    // Predicated region
    $region34: #{tpu_custom_call.1} parent=1 // pred_check
      _
    $region35: #{tpu_custom_call.1} parent=1 // pred_check_branch
      %84 = sbr.rel (0) target = $region37
    $region36: #{tpu_custom_call.1} parent=1 // pred_region
      %85 = dma.done [#allocation3], 128
    $region37: #{tpu_custom_call.1} parent=1 // pred_fallthru
      _
    // Predicated region
    $region38: #{tpu_custom_call.1} parent=1 // pred_check
      _
    $region39: #{tpu_custom_call.1} parent=1 // pred_check_branch
      %87 = sbr.rel (0) target = $region41
    $region40: #{tpu_custom_call.1} parent=1 // pred_region
      %88 = dma.done [#allocation6], 128
    $region41: #{tpu_custom_call.1} parent=1 // pred_fallthru
      _
    // Predicated region
    $region42: #{tpu_custom_call.1} parent=1 // pred_check
      _
    $region43: #{tpu_custom_call.1} parent=1 // pred_check_branch
      %90 = sbr.rel (0) target = $region45
    $region44: #{tpu_custom_call.1} parent=1 // pred_region
      %91 = dma.done [#allocation6], 768
    $region45: #{tpu_custom_call.1} parent=1 // pred_fallthru
      _
    // Predicated region
    $region46: #{tpu_custom_call.1} parent=1 // pred_check
      _
    $region47: #{tpu_custom_call.1} parent=1 // pred_check_branch
      %93 = sbr.rel (0) target = $region49
    $region48: #{tpu_custom_call.1} parent=1 // pred_region
      %94 = dma.done [#allocation9], 48
    $region49: #{tpu_custom_call.1} parent=1 // pred_fallthru
      _
    // Predicated region
    $region50: #{tpu_custom_call.1} parent=1 // pred_check
      _
    $region51: #{tpu_custom_call.1} parent=1 // pred_check_branch
      %96 = sbr.rel (0) target = $region53
    $region52: #{tpu_custom_call.1} parent=1 // pred_region
      %97 = dma.done [#allocation9], 256
    $region53: #{tpu_custom_call.1} parent=1 // pred_fallthru
      _
    %v99 = vld [vmem:[#allocation2] sm:$0xff]
    %v100 = vpack.c.bf16 %v99, %v99
    %v101 = vld [vmem:[#allocation7] sm:$0xff]
    %v102 = vld [vmem:[#allocation7 + $0x8] sm:$0xf]
    %v103 = vld [vmem:[#allocation7 + $0xc] sm:$0xff]
    %v104 = vld [vmem:[#allocation7 + $0x14] sm:$0xf]
    %v105 = vld [vmem:[#allocation7 + $0x18] sm:$0xff]
    %v106 = vld [vmem:[#allocation7 + $0x20] sm:$0xf]
    %v107 = vld [vmem:[#allocation7 + $0x24] sm:$0xff]
    %v108 = vld [vmem:[#allocation7 + $0x2c] sm:$0xf]
    %v109 = vld [vmem:[#allocation8] sm:$0x7]
    %v111 = vlaneseq
    %v112 = vshrl.u32 %v111, 7
    %v113 = vsub.s32 0, %v112
    %v114 = vrot.slane %v109, %v113
    %v115 = vlaneseq
    %v116 = vshrl.u32 %v115, 7
    %v117 = vsub.s32 1, %v116
    %v118 = vrot.slane %v109, %v117
    %v119 = vlaneseq
    %v120 = vshrl.u32 %v119, 7
    %v121 = vsub.s32 2, %v120
    %v122 = vrot.slane %v109, %v121
    %v134 = vunpack.c.l.b16 %v101
    %v135 = vunpack.c.h.b16 %v101
    %v136 = vunpack.c.l.b16 %v102
    %v137 = vunpack.c.l.b16 %v103
    %v138 = vunpack.c.h.b16 %v103
    %v139 = vunpack.c.l.b16 %v104
    %v140 = vunpack.c.l.b16 %v105
    %v141 = vunpack.c.h.b16 %v105
    %v142 = vunpack.c.l.b16 %v106
    %v143 = vunpack.c.l.b16 %v107
    %v144 = vunpack.c.h.b16 %v107
    %v145 = vunpack.c.l.b16 %v108
    %v146 = vpack.c.b16 %v137, %v134
    %v147 = vpack.c.b16 %v138, %v135
    %v148 = vpack.c.b16 %v139, %v136
    %v149 = vpack.c.b16 %v143, %v140
    %v150 = vpack.c.b16 %v144, %v141
    %v151 = vpack.c.b16 %v145, %v142
    %vm158 = vcmask 261120
    %v160 = vsel %vm158, %v100, 0
    %162 = vmatprep.subr.bf16.mxu0 %v147
    %163 = vmatpush1.bf16.msra.mxu0 %v146
    %164 = vmatprep.subr.bf16.mxu0 %v150
    %165 = vmatpush1.bf16.msra.mxu0 %v149
    %166 = vmatprep.subr.bf16.mxu0 0
    %167 = vmatpush1.bf16.msra.mxu0 0
    %168 = vmatprep.subr.bf16.mxu0 0
    %169 = vmatpush1.bf16.msra.mxu0 0
    %170 = vmatprep.subr.bf16.mxu0 0
    %171 = vmatpush1.bf16.msra.mxu0 0
    %172 = vmatprep.subr.bf16.mxu0 0
    %173 = vmatpush1.bf16.msra.mxu0 0
    %174 = vmatprep.subr.bf16.mxu0 0
    %175 = vmatpush1.bf16.msra.mxu0 0
    %176 = vmatprep.subr.bf16.mxu0 0
    %177 = vmatpush1.bf16.msra.mxu0 0
    %178 = vmatprep.subr.bf16.mxu0 0
    %179 = vmatpush1.bf16.msra.mxu0 0
    %180 = vmatprep.subr.bf16.mxu0 0
    %181 = vmatpush1.bf16.msra.mxu0 0
    %182 = vmatprep.subr.bf16.mxu0 0
    %183 = vmatpush1.bf16.msra.mxu0 0
    %184 = vmatprep.subr.bf16.mxu0 0
    %185 = vmatpush1.bf16.msra.mxu0 0
    %186 = vmatprep.subr.bf16.mxu0 0
    %187 = vmatpush1.bf16.msra.mxu0 0
    %188 = vmatprep.subr.bf16.mxu0 0
    %189 = vmatpush1.bf16.msra.mxu0 0
    %190 = vmatprep.subr.bf16.mxu0 0
    %191 = vmatpush1.bf16.msra.mxu0 0
    %192 = vmatprep.subr.bf16.mxu0 0
    %193 = vmatpush1.bf16.msra.mxu0 0
    %194 = vmatprep.mubr.bf16.mxu0 0
    %195 = vmatmul.mubr.bf16.gmra.mrb[0].mxu0 %v160
    %v196 = vpop.f32.mrb[0].mxu0
    %v197 = vadd.f32 %v114, %v196
    %v198 = vpop.f32.mrb[0].mxu0
    %v199 = vadd.f32 %v118, %v198
    %v200 = vpop.f32.mrb[0].mxu0
    %v201 = vpop.f32.mrb[0].mxu0
    %202 = vdwg.mxu0
    %203 = vmatprep.subr.bf16.mxu0 0
    %204 = vmatpush1.bf16.msra.mxu0 %v148
    %205 = vmatprep.subr.bf16.mxu0 0
    %206 = vmatpush1.bf16.msra.mxu0 %v151
    %207 = vmatprep.subr.bf16.mxu0 0
    %208 = vmatpush1.bf16.msra.mxu0 0
    %209 = vmatprep.subr.bf16.mxu0 0
    %210 = vmatpush1.bf16.msra.mxu0 0
    %211 = vmatprep.subr.bf16.mxu0 0
    %212 = vmatpush1.bf16.msra.mxu0 0
    %213 = vmatprep.subr.bf16.mxu0 0
    %214 = vmatpush1.bf16.msra.mxu0 0
    %215 = vmatprep.subr.bf16.mxu0 0
    %216 = vmatpush1.bf16.msra.mxu0 0
    %217 = vmatprep.subr.bf16.mxu0 0
    %218 = vmatpush1.bf16.msra.mxu0 0
    %219 = vmatprep.subr.bf16.mxu0 0
    %220 = vmatpush1.bf16.msra.mxu0 0
    %221 = vmatprep.subr.bf16.mxu0 0
    %222 = vmatpush1.bf16.msra.mxu0 0
    %223 = vmatprep.subr.bf16.mxu0 0
    %224 = vmatpush1.bf16.msra.mxu0 0
    %225 = vmatprep.subr.bf16.mxu0 0
    %226 = vmatpush1.bf16.msra.mxu0 0
    %227 = vmatprep.subr.bf16.mxu0 0
    %228 = vmatpush1.bf16.msra.mxu0 0
    %229 = vmatprep.subr.bf16.mxu0 0
    %230 = vmatpush1.bf16.msra.mxu0 0
    %231 = vmatprep.subr.bf16.mxu0 0
    %232 = vmatpush1.bf16.msra.mxu0 0
    %233 = vmatprep.subr.bf16.mxu0 0
    %234 = vmatpush1.bf16.msra.mxu0 0
    %235 = vmatprep.mubr.bf16.mxu0 0
    %236 = vmatmul.mubr.bf16.gmra.mrb[0].mxu0 %v160
    %v237 = vpop.f32.mrb[0].mxu0
    %v238 = vadd.f32 %v122, %v237
    %v239 = vpop.f32.mrb[0].mxu0
    %v240 = vpop.f32.mrb[0].mxu0
    %v241 = vpop.f32.mrb[0].mxu0
    %242 = vdwg.mxu0
    %v243 = vmax.f32 %v197, 0.0
    %v244 = vmax.f32 %v199, 0.0
    %v245 = vmax.f32 %v238, 0.0
    %v246 = vpack.c.bf16 %v243, %v243
    %v247 = vpack.c.bf16 %v244, %v244
    %v250 = vunpack.c.l.b16 %v246
    %v251 = vunpack.c.l.b16 %v247
    %v252 = vpack.c.b16 %v251, %v250
    %254 = vst [vmem:[#allocation11] sm:$0xff] %v252
    %v255 = vpack.c.bf16 %v245, %v245
    %vm256 = vcmask 125952
    %257 = vst.msk [vmem:[#allocation12] sm:$0xf] %vm256, %v255
    %v258 = vld [vmem:[#allocation5] sm:$0xff]
    %v259 = vsel %vm158, %v258, 0.0
    %260 = vadd.xlane.f32.xlu0 %v259
    %v261 = vpop.xlane.xlu0 %260
    %v262 = vrcp.pop 32.0
    %v263 = vmul.f32 %v261, %v262
    %v264 = vsub.f32 %v258, %v263
    %v265 = vmul.f32 %v264, %v264
    %v266 = vsel %vm158, %v265, 0.0
    %267 = vadd.xlane.f32.xlu0 %v266
    %v268 = vpop.xlane.xlu0 %267
    %v269 = vmul.f32 %v268, %v262
    %v270 = vadd.f32 %v269, 1e-05
    %v271 = vrsqrt.pop %v270
    %v272 = vmul.f32 %v264, %v271
    %v273 = vpack.c.bf16 %v272, %v272
    %v274 = vld [vmem:[#allocation10] sm:$0xf]
    %v275 = vld [vmem:[#allocation10 + $0x4] sm:$0xf]
    %v276 = vld [vmem:[#allocation10 + $0x8] sm:$0xf]
    %v277 = vld [vmem:[#allocation10 + $0xc] sm:$0xf]
    %v278 = vld [vmem:[%s6] sm:$0x1]
    %v280 = vlaneseq
    %v281 = vshrl.u32 %v280, 7
    %v282 = vsub.s32 0, %v281
    %v283 = vrot.slane %v278, %v282
    %v289 = vunpack.c.l.b16 %v274
    %v290 = vunpack.c.l.b16 %v275
    %v291 = vunpack.c.l.b16 %v276
    %v292 = vunpack.c.l.b16 %v277
    %v293 = vpack.c.b16 %v290, %v289
    %v294 = vpack.c.b16 %v292, %v291
    %v298 = vsel %vm158, %v273, 0
    %300 = vmatprep.subr.bf16.mxu0 0
    %301 = vmatpush1.bf16.msra.mxu0 %v293
    %302 = vmatprep.subr.bf16.mxu0 0
    %303 = vmatpush1.bf16.msra.mxu0 %v294
    %304 = vmatprep.subr.bf16.mxu0 0
    %305 = vmatpush1.bf16.msra.mxu0 0
    %306 = vmatprep.subr.bf16.mxu0 0
    %307 = vmatpush1.bf16.msra.mxu0 0
    %308 = vmatprep.subr.bf16.mxu0 0
    %309 = vmatpush1.bf16.msra.mxu0 0
    %310 = vmatprep.subr.bf16.mxu0 0
    %311 = vmatpush1.bf16.msra.mxu0 0
    %312 = vmatprep.subr.bf16.mxu0 0
    %313 = vmatpush1.bf16.msra.mxu0 0
    %314 = vmatprep.subr.bf16.mxu0 0
    %315 = vmatpush1.bf16.msra.mxu0 0
    %316 = vmatprep.subr.bf16.mxu0 0
    %317 = vmatpush1.bf16.msra.mxu0 0
    %318 = vmatprep.subr.bf16.mxu0 0
    %319 = vmatpush1.bf16.msra.mxu0 0
    %320 = vmatprep.subr.bf16.mxu0 0
    %321 = vmatpush1.bf16.msra.mxu0 0
    %322 = vmatprep.subr.bf16.mxu0 0
    %323 = vmatpush1.bf16.msra.mxu0 0
    %324 = vmatprep.subr.bf16.mxu0 0
    %325 = vmatpush1.bf16.msra.mxu0 0
    %326 = vmatprep.subr.bf16.mxu0 0
    %327 = vmatpush1.bf16.msra.mxu0 0
    %328 = vmatprep.subr.bf16.mxu0 0
    %329 = vmatpush1.bf16.msra.mxu0 0
    %330 = vmatprep.subr.bf16.mxu0 0
    %331 = vmatpush1.bf16.msra.mxu0 0
    %332 = vmatprep.mubr.bf16.mxu0 0
    %333 = vmatmul.mubr.bf16.gmra.mrb[0].mxu0 %v298
    %v334 = vpop.f32.mrb[0].mxu0
    %v335 = vadd.f32 %v283, %v334
    %v336 = vpop.f32.mrb[0].mxu0
    %v337 = vpop.f32.mrb[0].mxu0
    %v338 = vpop.f32.mrb[0].mxu0
    %339 = vdwg.mxu0
    %v340 = vpack.c.bf16 %v335, %v335
    %vm341 = vcmask 257024
    %342 = vst.msk [vmem:[#allocation14] sm:$0xf] %vm341, %v340
    %v343 = vld [vmem:[%s5] sm:$0xf]
    %v344 = vld [vmem:[%s5 + $0x4] sm:$0xf]
    %v345 = vld [vmem:[%s5 + $0x8] sm:$0xf]
    %v346 = vld [vmem:[%s5 + $0xc] sm:$0xf]
    %v347 = vld [vmem:[%s7] sm:$0x1]
    %v349 = vlaneseq
    %v350 = vshrl.u32 %v349, 7
    %v351 = vsub.s32 0, %v350
    %v352 = vrot.slane %v347, %v351
    %v358 = vunpack.c.l.b16 %v343
    %v359 = vunpack.c.l.b16 %v344
    %v360 = vunpack.c.l.b16 %v345
    %v361 = vunpack.c.l.b16 %v346
    %v362 = vpack.c.b16 %v359, %v358
    %v363 = vpack.c.b16 %v361, %v360
    %366 = vmatprep.subr.bf16.mxu0 0
    %367 = vmatpush1.bf16.msra.mxu0 %v362
    %368 = vmatprep.subr.bf16.mxu0 0
    %369 = vmatpush1.bf16.msra.mxu0 %v363
    %370 = vmatprep.subr.bf16.mxu0 0
    %371 = vmatpush1.bf16.msra.mxu0 0
    %372 = vmatprep.subr.bf16.mxu0 0
    %373 = vmatpush1.bf16.msra.mxu0 0
    %374 = vmatprep.subr.bf16.mxu0 0
    %375 = vmatpush1.bf16.msra.mxu0 0
    %376 = vmatprep.subr.bf16.mxu0 0
    %377 = vmatpush1.bf16.msra.mxu0 0
    %378 = vmatprep.subr.bf16.mxu0 0
    %379 = vmatpush1.bf16.msra.mxu0 0
    %380 = vmatprep.subr.bf16.mxu0 0
    %381 = vmatpush1.bf16.msra.mxu0 0
    %382 = vmatprep.subr.bf16.mxu0 0
    %383 = vmatpush1.bf16.msra.mxu0 0
    %384 = vmatprep.subr.bf16.mxu0 0
    %385 = vmatpush1.bf16.msra.mxu0 0
    %386 = vmatprep.subr.bf16.mxu0 0
    %387 = vmatpush1.bf16.msra.mxu0 0
    %388 = vmatprep.subr.bf16.mxu0 0
    %389 = vmatpush1.bf16.msra.mxu0 0
    %390 = vmatprep.subr.bf16.mxu0 0
    %391 = vmatpush1.bf16.msra.mxu0 0
    %392 = vmatprep.subr.bf16.mxu0 0
    %393 = vmatpush1.bf16.msra.mxu0 0
    %394 = vmatprep.subr.bf16.mxu0 0
    %395 = vmatpush1.bf16.msra.mxu0 0
    %396 = vmatprep.subr.bf16.mxu0 0
    %397 = vmatpush1.bf16.msra.mxu0 0
    %398 = vmatprep.mubr.bf16.mxu0 0
    %399 = vmatmul.mubr.bf16.gmra.mrb[0].mxu0 %v298
    %v400 = vpop.f32.mrb[0].mxu0
    %v401 = vadd.f32 %v352, %v400
    %v402 = vpop.f32.mrb[0].mxu0
    %v403 = vpop.f32.mrb[0].mxu0
    %v404 = vpop.f32.mrb[0].mxu0
    %405 = vdwg.mxu0
    %v406 = vpack.c.bf16 %v401, %v401
    %407 = vst.msk [vmem:[#allocation15] sm:$0xf] %vm341, %v406
    // Predicated region
    $region54: #{tpu_custom_call.1} parent=1 // pred_check
      _
    $region55: #{tpu_custom_call.1} parent=1 // pred_check_branch
      %409 = sbr.rel (0) target = $region57
    $region56: #{tpu_custom_call.1} parent=1 // pred_region
      %s411 = ssub.s32 128, 128
      %412 = vsyncadd [#allocation4], %s411
      %s414 = sshll.u32 [#allocation11], 4
      %s415 = int_to_ptr.vmem [resolvable:$true] %s414
      %417 = dma.vmem_to_hbm [thread:$0]  %s415, 128, %s8, [#allocation4]
    $region57: #{tpu_custom_call.1} parent=1 // pred_fallthru
      _
    // Predicated region
    $region58: #{tpu_custom_call.1} parent=1 // pred_check
      _
    $region59: #{tpu_custom_call.1} parent=1 // pred_check_branch
      %419 = sbr.rel (0) target = $region61
    $region60: #{tpu_custom_call.1} parent=1 // pred_region
      %s421 = ssub.s32 64, 64
      %422 = vsyncadd [#allocation13], %s421
      %s424 = sshll.u32 [#allocation12], 4
      %s425 = int_to_ptr.vmem [resolvable:$true] %s424
      %427 = dma.vmem_to_hbm [thread:$0]  %s425, 64, %s9, [#allocation13]
    $region61: #{tpu_custom_call.1} parent=1 // pred_fallthru
      _
    // Predicated region
    $region62: #{tpu_custom_call.1} parent=1 // pred_check
      _
    $region63: #{tpu_custom_call.1} parent=1 // pred_check_branch
      %429 = sbr.rel (0) target = $region65
    $region64: #{tpu_custom_call.1} parent=1 // pred_region
      %s431 = ssub.s32 64, 64
      %432 = vsyncadd [#allocation13], %s431
      %s434 = sshll.u32 [#allocation14], 4
      %s435 = int_to_ptr.vmem [resolvable:$true] %s434
      %437 = dma.vmem_to_hbm [thread:$0]  %s435, 64, %s10, [#allocation13]
    $region65: #{tpu_custom_call.1} parent=1 // pred_fallthru
      _
    // Predicated region
    $region66: #{tpu_custom_call.1} parent=1 // pred_check
      _
    $region67: #{tpu_custom_call.1} parent=1 // pred_check_branch
      %439 = sbr.rel (0) target = $region69
    $region68: #{tpu_custom_call.1} parent=1 // pred_region
      %s441 = ssub.s32 64, 64
      %442 = vsyncadd [#allocation16], %s441
      %s444 = sshll.u32 [#allocation15], 4
      %s445 = int_to_ptr.vmem [resolvable:$true] %s444
      %447 = dma.vmem_to_hbm [thread:$0]  %s445, 64, %s11, [#allocation16]
    $region69: #{tpu_custom_call.1} parent=1 // pred_fallthru
      _
    // Predicated region
    $region70: #{tpu_custom_call.1} parent=1 // pred_check
      _
    $region71: #{tpu_custom_call.1} parent=1 // pred_check_branch
      %449 = sbr.rel (0) target = $region73
    $region72: #{tpu_custom_call.1} parent=1 // pred_region
      %450 = dma.done [#allocation4], 128
    $region73: #{tpu_custom_call.1} parent=1 // pred_fallthru
      _
    // Predicated region
    $region74: #{tpu_custom_call.1} parent=1 // pred_check
      _
    $region75: #{tpu_custom_call.1} parent=1 // pred_check_branch
      %452 = sbr.rel (0) target = $region77
    $region76: #{tpu_custom_call.1} parent=1 // pred_region
      %453 = dma.done [#allocation13], 64
    $region77: #{tpu_custom_call.1} parent=1 // pred_fallthru
      _
    // Predicated region
    $region78: #{tpu_custom_call.1} parent=1 // pred_check
      _
    $region79: #{tpu_custom_call.1} parent=1 // pred_check_branch
      %455 = sbr.rel (0) target = $region81
    $region80: #{tpu_custom_call.1} parent=1 // pred_region
      %456 = dma.done [#allocation13], 64
    $region81: #{tpu_custom_call.1} parent=1 // pred_fallthru
      _
    // Predicated region
    $region82: #{tpu_custom_call.1} parent=1 // pred_check
      _
    $region83: #{tpu_custom_call.1} parent=1 // pred_check_branch
      %458 = sbr.rel (0) target = $region85
    $region84: #{tpu_custom_call.1} parent=1 // pred_region
      %459 = dma.done [#allocation16], 64
    $region85: #{tpu_custom_call.1} parent=1 // pred_fallthru
      _
    %460 = vsyncpa [#allocation3], 1
    %461 = vsyncpa [#allocation6], 1
    %462 = vsyncpa [#allocation9], 1
    %463 = vsyncpa [#allocation4], 1
    %464 = vsyncpa [#allocation13], 1
    %465 = vsyncpa [#allocation16], 1

</llo_original>
